<compile_context>
chip_gen: v6e
topology: v6e:2x2x1
jax: 0.10.0
libtpu: 0.0.40
codegen_flags: <defaults>
</compile_context>

<pallas_src>
import functools

import jax
import jax.numpy as jnp
from jax.experimental import pallas as pl
from jax.experimental.pallas import tpu as pltpu

# --- sizes implied by the module -------------------------------------------
N1 = 5
INPUT_SIZE = 2 ** N1            # 32
L = 4
OUTPUT_SIZE = 2 * L * N1 * 3    # 120
HIDDEN_SIZE = 64                # hidden_size is a free ctor arg; pick 64
BATCH = 8

_SUBLANE = 8
_TILE_B_CAP = 4096              # sweepable; ~5 MiB double-buffered VMEM


def _round_up(n: int, m: int) -> int:
    return ((n + m - 1) // m) * m


def _choose_tile_b(b8: int, cap: int = _TILE_B_CAP) -> int:
    """Pick a batch tile: multiple of 8, divides b8 (so no extra batch pad),
    <= cap, and for large batches <= b8//2 so grid >= 2 steps (v7x dual-TC)."""
    limit = min(cap, b8)
    if b8 >= 2 * _SUBLANE * 128:          # "large" batch: keep >= 2 grid steps
        limit = min(limit, b8 // 2)
    limit = max(_SUBLANE, (limit // _SUBLANE) * _SUBLANE)
    m = b8 // _SUBLANE                    # b8 = 8 * m
    for d in range(limit // _SUBLANE, 0, -1):
        if m % d == 0:
            return d * _SUBLANE
    return _SUBLANE


# --- Pallas kernel: fused single-matmul MLP ---------------------------------
def fused_mlp_kernel(x_ref, w_ref, b_ref, o_ref):
    # In-kernel f32 -> bf16 cast of x (hides under DMA/MXU slack).
    x_bf = x_ref[...].astype(jnp.bfloat16)
    # (TB, IN)bf16 @ (IN, OUT)bf16 with f32 accumulation on the MXU.
    acc = jnp.dot(x_bf, w_ref[...], preferred_element_type=jnp.float32)
    # Single f32 bias broadcast + cast epilogue (VPU, f32 path).
    o_ref[...] = (acc + b_ref[...]).astype(o_ref.dtype)


@functools.partial(jax.jit, static_argnames=())
def mfa_perceptron_forward(x, w1, b1, w2, b2):
    """Fused two-layer Linear forward: out = (x @ W1 + b1) @ W2 + b2.

    Weights are stored transposed vs. PyTorch: (in_features, out_features).
    """
    batch, in_features = x.shape
    out_features = w2.shape[1]

    # -- algebraic fusion (done once, f32, on the small weight matrices) -----
    w_fused = (w1 @ w2).astype(jnp.bfloat16)          # (IN, OUT) bf16 for MXU
    b_fused = (b1 @ w2 + b2).astype(jnp.float32)      # (1, OUT)  f32 epilogue

    # -- batch tiling: round batch to sublane multiple, tile divides it ------
    b8 = _round_up(batch, _SUBLANE)
    tile_b = _choose_tile_b(b8)
    if b8 != batch:
        x = jnp.pad(x, ((0, b8 - batch), (0, 0)))
    grid = (b8 // tile_b,)

    out = pl.pallas_call(
        fused_mlp_kernel,
        out_shape=jax.ShapeDtypeStruct((b8, out_features), jnp.float32),
        grid=grid,
        in_specs=[
            pl.BlockSpec((tile_b, in_features), lambda i: (i, 0)),     # x tiles (f32)
            pl.BlockSpec((in_features, out_features), lambda i: (0, 0)),  # W resident
            pl.BlockSpec((1, out_features), lambda i: (0, 0)),            # b resident
        ],
        # Output block last dim == full array dim (120): legal, no lane pad,
        # no post-kernel slice copy.
        out_specs=pl.BlockSpec((tile_b, out_features), lambda i: (i, 0)),
        compiler_params=pltpu.CompilerParams(
            dimension_semantics=("parallel",)),
    )(x, w_fused, b_fused)

    if b8 != batch:
        out = out[:batch]
    return out


# --- deterministic parameter init (matches nn.Linear shapes) -----------------
def init_params(key, in_size, hidden_size, out_size):
    k1, k2, k3, k4 = jax.random.split(key, 4)
    # nn.Linear default: U(-1/sqrt(fan_in), 1/sqrt(fan_in))
    lim1 = 1.0 / jnp.sqrt(jnp.float32(in_size))
    lim2 = 1.0 / jnp.sqrt(jnp.float32(hidden_size))
    # stored transposed vs. PyTorch: (in, out)
    w1 = jax.random.uniform(k1, (in_size, hidden_size), jnp.float32, -lim1, lim1)
    b1 = jax.random.uniform(k2, (1, hidden_size), jnp.float32, -lim1, lim1)
    w2 = jax.random.uniform(k3, (hidden_size, out_size), jnp.float32, -lim2, lim2)
    b2 = jax.random.uniform(k4, (1, out_size), jnp.float32, -lim2, lim2)
    return w1, b1, w2, b2


if __name__ == "__main__":
    key = jax.random.PRNGKey(0)
    k_x, k_p = jax.random.split(key)

    x = jax.random.normal(k_x, (BATCH, INPUT_SIZE), jnp.float32)
    w1, b1, w2, b2 = init_params(k_p, INPUT_SIZE, HIDDEN_SIZE, OUTPUT_SIZE)

    out = mfa_perceptron_forward(x, w1, b1, w2, b2)
    out = jax.block_until_ready(out)

    # reference check in plain f32 JAX (kernel uses bf16 MXU inputs -> loose tol)
    ref = (x @ w1 + b1) @ w2 + b2
    assert out.shape == (BATCH, OUTPUT_SIZE)
    assert jnp.allclose(out, ref, atol=1e-2, rtol=1e-2), float(
        jnp.max(jnp.abs(out - ref)))

    print("KERNEL_OK")
</pallas_src>

<mosaic_0001>
module attributes {stable_mosaic.version = 11 : i64} {
  func.func @fused_mlp_kernel(%arg0: i32, %arg1: memref<8x32xf32, #tpu.memory_space<vmem>>, %arg2: memref<32x120xbf16, #tpu.memory_space<vmem>>, %arg3: memref<1x120xf32, #tpu.memory_space<vmem>>, %arg4: memref<8x120xf32, #tpu.memory_space<vmem>>) attributes {dimension_semantics = [#tpu.dimension_semantics<parallel>], iteration_bounds = array<i64: 1>, scalar_prefetch = 0 : i64, scratch_operands = 0 : i64, tpu.core_type = #tpu.core_type<tc>, window_params = [{transform_indices = @transform_0, window_bounds = array<i64: 8, 32>}, {pipeline_mode = #tpu.pipeline_mode<synchronous>, transform_indices = @transform_1, window_bounds = array<i64: 32, 120>}, {pipeline_mode = #tpu.pipeline_mode<synchronous>, transform_indices = @transform_2, window_bounds = array<i64: 1, 120>}, {transform_indices = @transform_3, window_bounds = array<i64: 8, 120>}]} {
    %c0 = arith.constant 0 : index
    %c0_0 = arith.constant 0 : index
    %0 = vector.load %arg1[%c0, %c0_0] : memref<8x32xf32, #tpu.memory_space<vmem>>, vector<8x32xf32>
    %1 = arith.truncf %0 : vector<8x32xf32> to vector<8x32xbf16>
    %c0_1 = arith.constant 0 : index
    %c0_2 = arith.constant 0 : index
    %2 = vector.load %arg2[%c0_1, %c0_2] : memref<32x120xbf16, #tpu.memory_space<vmem>>, vector<32x120xbf16>
    %cst = arith.constant dense<0.000000e+00> : vector<8x120xf32>
    %3 = tpu.matmul %1, %2, %cst {dimension_numbers = #tpu.dot_dimension_numbers<[1], [0], [0], [1], [0, 0, 1, 1], [], []>} : vector<8x32xbf16>, vector<32x120xbf16>, vector<8x120xf32> -> vector<8x120xf32>
    %c0_3 = arith.constant 0 : index
    %c0_4 = arith.constant 0 : index
    %4 = vector.load %arg3[%c0_3, %c0_4] : memref<1x120xf32, #tpu.memory_space<vmem>>, vector<1x120xf32>
    %5 = vector.broadcast %4 : vector<1x120xf32> to vector<8x120xf32>
    %6 = arith.addf %3, %5 : vector<8x120xf32>
    %c0_5 = arith.constant 0 : index
    %c0_6 = arith.constant 0 : index
    %7 = vector.load %arg4[%c0_5, %c0_6] : memref<8x120xf32, #tpu.memory_space<vmem>>, vector<8x120xf32>
    tpu.vector_store %arg4[%c0_5, %c0_6], %6 {strides = array<i32>} : memref<8x120xf32, #tpu.memory_space<vmem>>, vector<8x120xf32>,
    return
  }
  func.func @transform_0(%arg0: i32) -> (i32, i32) {
    %c0_i32 = arith.constant 0 : i32
    %c0_i32_0 = arith.constant 0 : i32
    return %arg0, %c0_i32 : i32, i32
  }
  func.func @transform_1(%arg0: i32) -> (i32, i32) {
    %c0_i32 = arith.constant 0 : i32
    %c0_i32_0 = arith.constant 0 : i32
    %c0_i32_1 = arith.constant 0 : i32
    return %c0_i32, %c0_i32_0 : i32, i32
  }
  func.func @transform_2(%arg0: i32) -> (i32, i32) {
    %c0_i32 = arith.constant 0 : i32
    %c0_i32_0 = arith.constant 0 : i32
    %c0_i32_1 = arith.constant 0 : i32
    return %c0_i32, %c0_i32_0 : i32, i32
  }
  func.func @transform_3(%arg0: i32) -> (i32, i32) {
    %c0_i32 = arith.constant 0 : i32
    %c0_i32_0 = arith.constant 0 : i32
    return %arg0, %c0_i32 : i32, i32
  }
}

</mosaic_0001>

<llo_original>
// kernel: mfa_perceptron_forward.1
$region0: #{mfa_perceptron_forward.1}
  #allocation0 [shape = 'u32[]', space=smem, size = 0x4, offset = 0x4, fixed_abs, tag = 'smem constant byte address 0x4 - core index']
  #allocation1 [shape = 'u32[144,128]{1,0:T(1,128)}', space=vmem, size = 0x12000, scoped, tag = 'internal scratch']
  %s0 = inlined_call_operand.vmem [shape: f32[8,32], index: 0, kind: input, shape index: {}]
  %s1 = inlined_call_operand.vmem [shape: bf16[32,120], index: 1, kind: input, shape index: {}]
  %s2 = inlined_call_operand.vmem [shape: f32[1,120], index: 2, kind: input, shape index: {}]
  %s3 = inlined_call_operand.hbm [shape: f32[8,120], index: 3, kind: output, shape index: {}]
  %s4 = sld [smem:[#allocation0]]
  $region22: #{mfa_perceptron_forward.1} parent=0
    _
  %s6 = ssub.s32 1, %s4
  %s7 = scalar_select 0, %s6, %s4
  $region1: #{mfa_perceptron_forward.1} parent=0
    #allocation2 [shape = 'u8[4096]{0}', space=vmem, size = 0x1000, scoped, tag = 'output window, operand 0, single buffered']
    #allocation3 [shape = 's32[1]{0}', space=sflag, size = 0x4, scoped, tag = 'scoped memory for mfa_perceptron_forward.1']
    %8 = vsyncpa [#allocation3], 0
    // Predicated region
    $region2: #{mfa_perceptron_forward.1} parent=1 // pred_check
      _
    $region3: #{mfa_perceptron_forward.1} parent=1 // pred_check_branch
      %10 = sbr.rel (0) target = $region5
    $region4: #{mfa_perceptron_forward.1} parent=1 // pred_region
      _
    $region5: #{mfa_perceptron_forward.1} parent=1 // pred_fallthru
      _
    // Predicated region
    $region6: #{mfa_perceptron_forward.1} parent=1 // pred_check
      _
    $region7: #{mfa_perceptron_forward.1} parent=1 // pred_check_branch
      %12 = sbr.rel (0) target = $region9
    $region8: #{mfa_perceptron_forward.1} parent=1 // pred_region
      _
    $region9: #{mfa_perceptron_forward.1} parent=1 // pred_fallthru
      _
    // Predicated region
    $region10: #{mfa_perceptron_forward.1} parent=1 // pred_check
      _
    $region11: #{mfa_perceptron_forward.1} parent=1 // pred_check_branch
      %14 = sbr.rel (0) target = $region13
    $region12: #{mfa_perceptron_forward.1} parent=1 // pred_region
      _
    $region13: #{mfa_perceptron_forward.1} parent=1 // pred_fallthru
      _
    %v16 = vld [vmem:[%s0] sm:$0xff]
    %v17 = vpack.c.bf16 %v16, %v16
    %v18 = vld [vmem:[%s1] sm:$0xf]
    %v19 = vld [vmem:[%s1 + $0x4] sm:$0xf]
    %v20 = vld [vmem:[%s1 + $0x8] sm:$0xf]
    %v21 = vld [vmem:[%s1 + $0xc] sm:$0xf]
    %v22 = vld [vmem:[%s2] sm:$0x1]
    %v24 = vlaneseq
    %v25 = vshrl.u32 %v24, 7
    %v26 = vsub.s32 0, %v25
    %v27 = vrot.slane %v22, %v26
    %v33 = vunpack.c.l.b16 %v18
    %v34 = vunpack.c.l.b16 %v19
    %v35 = vunpack.c.l.b16 %v20
    %v36 = vunpack.c.l.b16 %v21
    %v37 = vpack.c.b16 %v34, %v33
    %v38 = vpack.c.b16 %v36, %v35
    %vm41 = vcmask 261120
    %v43 = vsel %vm41, %v17, 0
    %45 = vmatprep.subr.bf16.mxu0 0
    %46 = vmatpush1.bf16.msra.mxu0 0
    %47 = vmatprep.subr.bf16.mxu0 0
    %48 = vmatpush1.bf16.msra.mxu0 0
    %49 = vmatprep.subr.bf16.mxu0 0
    %50 = vmatpush1.bf16.msra.mxu0 0
    %51 = vmatprep.subr.bf16.mxu0 0
    %52 = vmatpush1.bf16.msra.mxu0 0
    %53 = vmatprep.subr.bf16.mxu0 0
    %54 = vmatpush1.bf16.msra.mxu0 0
    %55 = vmatprep.subr.bf16.mxu0 0
    %56 = vmatpush1.bf16.msra.mxu0 0
    %57 = vmatprep.subr.bf16.mxu0 0
    %58 = vmatpush1.bf16.msra.mxu0 %v38
    %59 = vmatprep.subr.bf16.mxu0 0
    %60 = vmatpush1.bf16.msra.mxu0 %v37
    %61 = vmatprep.subr.bf16.mxu0 0
    %62 = vmatpush2.bf16.msra.mxu0 0
    %63 = vmatprep.subr.bf16.mxu0 0
    %64 = vmatpush2.bf16.msra.mxu0 0
    %65 = vmatprep.subr.bf16.mxu0 0
    %66 = vmatpush2.bf16.msra.mxu0 0
    %67 = vmatprep.subr.bf16.mxu0 0
    %68 = vmatpush2.bf16.msra.mxu0 0
    %69 = vmatprep.subr.bf16.mxu0 0
    %70 = vmatpush2.bf16.msra.mxu0 0
    %71 = vmatprep.subr.bf16.mxu0 0
    %72 = vmatpush2.bf16.msra.mxu0 0
    %73 = vmatprep.subr.bf16.mxu0 0
    %74 = vmatpush2.bf16.msra.mxu0 0
    %75 = vmatprep.subr.bf16.mxu0 0
    %76 = vmatpush2.bf16.msra.mxu0 0
    %77 = vmatprep.mubr.bf16.mxu0 0
    %78 = vmatmul.mubr.bf16.gmra.mxu0 %v43
    %v79 = vpop.f32.mrf.mxu0
    %v80 = vadd.f32 %v27, %v79
    %v81 = vpop.f32.mrf.mxu0
    %v82 = vpop.f32.mrf.mxu0
    %v83 = vpop.f32.mrf.mxu0
    %84 = vdwg.mxu0
    %vm85 = vcmask 982016
    %86 = vst.msk [vmem:[#allocation2] sm:$0xff] %vm85, %v80
    // Predicated region
    $region14: #{mfa_perceptron_forward.1} parent=1 // pred_check
      _
    $region15: #{mfa_perceptron_forward.1} parent=1 // pred_check_branch
      %88 = sbr.rel (0) target = $region17
    $region16: #{mfa_perceptron_forward.1} parent=1 // pred_region
      %s90 = ssub.s32 128, 128
      %91 = vsyncadd [#allocation3], %s90
      %s93 = sshll.u32 [#allocation2], 4
      %s94 = int_to_ptr.vmem [resolvable:$true] %s93
      %96 = dma.vmem_to_hbm [thread:$0]  %s94, 128, %s3, [#allocation3]
    $region17: #{mfa_perceptron_forward.1} parent=1 // pred_fallthru
      _
    // Predicated region
    $region18: #{mfa_perceptron_forward.1} parent=1 // pred_check
      _
    $region19: #{mfa_perceptron_forward.1} parent=1 // pred_check_branch
      %98 = sbr.rel (0) target = $region21
    $region20: #{mfa_perceptron_forward.1} parent=1 // pred_region
      %99 = dma.done [#allocation3], 128
    $region21: #{mfa_perceptron_forward.1} parent=1 // pred_fallthru
      _
    %100 = vsyncpa [#allocation3], 1

</llo_original>
